<compile_context>
chip_gen: v7x
topology: tpu7x:2x2x1
jax: 0.10.0
libtpu: 0.0.40
codegen_flags: <defaults>
</compile_context>

<pallas_src>
import functools

import jax
import jax.numpy as jnp
from jax.experimental import pallas as pl
from jax.experimental.pallas import tpu as pltpu


def _round_up(x: int, m: int) -> int:
    return ((x + m - 1) // m) * m


# Keep the lane-dense (pad-output-to-128) store only while the padded writeback
# is cheap; above this many rows the write amplification of a 4-wide output
# padded to 128 dominates HBM traffic, so store the true width instead.
_LANE_PAD_MAX_ROWS = 2048
# Split the grid into >= 2 steps above this many rows so both TensorCores on
# v7x get work (on single-TC chips this only costs one extra ~0.35 us step).
_MEGACORE_SPLIT_ROWS = 512


def _choose_batch_tile(batch: int, desired_tile: int) -> int:
    """Pick the batch tile.

    Rules: multiple of 8 (f32 sublane); as large as requested (amortize per-step
    overhead); >= 2 grid steps once the batch is large (v7x megacore); and
    prefer a tile that divides the 8-aligned batch so x never needs a pad copy.
    """
    batch8 = _round_up(batch, 8)
    tile = min(_round_up(max(desired_tile, 8), 8), batch8)
    if batch8 >= _MEGACORE_SPLIT_ROWS:
        tile = min(tile, _round_up(pl.cdiv(batch8, 2), 8))
    if batch8 % tile != 0:
        # Look for a divisor of batch8 (multiple of 8) not much smaller than the
        # target tile; if none exists, keep the tile and pad the batch instead.
        for t in range(tile, max(tile // 2, 8) - 1, -8):
            if batch8 % t == 0:
                return t
    return tile


def _mlp_kernel(num_layers, *refs):
    """Fused MLP forward: (Linear -> Tanh) * (num_layers-1) -> Linear.

    refs = (x_ref, w0_ref, b0_ref, w1_ref, b1_ref, ..., out_ref)
    x_ref / out_ref are (batch_tile, feat) VMEM tiles that advance with the
    grid; weight/bias refs are full arrays pinned in VMEM (constant index_map).
    """
    x_ref = refs[0]
    out_ref = refs[-1]
    param_refs = refs[1:-1]

    h = x_ref[...]
    for layer in range(num_layers):
        w_ref = param_refs[2 * layer]
        b_ref = param_refs[2 * layer + 1]
        h = jnp.dot(h, w_ref[...], preferred_element_type=jnp.float32) + b_ref[...]
        if layer < num_layers - 1:
            h = jnp.tanh(h)  # EUP transcendental slot — effectively free.
    out_ref[...] = h.astype(out_ref.dtype)


def value_network_forward(x, weights, biases, *, batch_tile=1024):
    """Run the fused ValueNetwork forward in a single Pallas TPU kernel.

    Args:
      x: (batch, num_inputs) float32
      weights: list of (in_f, out_f) float32 arrays (already transposed vs torch)
      biases:  list of (out_f,) float32 arrays
      batch_tile: desired rows per grid step (auto-adjusted; multiple of 8).
    Returns:
      (batch, num_outputs) float32
    """
    num_layers = len(weights)
    batch, num_inputs = x.shape
    num_outputs = weights[-1].shape[1]

    # --- batch tiling: only pad x when the chosen tile does not divide batch.
    tile = _choose_batch_tile(batch, batch_tile)
    padded_batch = _round_up(batch, tile)
    x_p = x if padded_batch == batch else jnp.pad(x, ((0, padded_batch - batch), (0, 0)))

    # --- output layout: lane-dense 128-wide padded store only while cheap;
    # for large batch store the true width (legal: last dim == full array dim)
    # to avoid ~32x HBM write amplification and the column re-slice.
    weights = list(weights)
    biases = list(biases)
    pad_lanes = padded_batch <= _LANE_PAD_MAX_ROWS
    out_cols = _round_up(num_outputs, 128) if pad_lanes else num_outputs
    if out_cols != num_outputs:
        weights[-1] = jnp.pad(weights[-1], ((0, 0), (0, out_cols - num_outputs)))
        biases[-1] = jnp.pad(biases[-1], ((0, out_cols - num_outputs),))

    grid = (padded_batch // tile,)

    # x advances with the grid; weights/biases use constant index_maps so they
    # stay resident in VMEM (no re-DMA between batch tiles).
    args = [x_p]
    in_specs = [pl.BlockSpec((tile, num_inputs), lambda i: (i, 0))]
    for w, b in zip(weights, biases):
        b2 = b.reshape(1, -1)
        args.append(w)
        args.append(b2)
        in_specs.append(pl.BlockSpec(w.shape, lambda i: (0, 0)))
        in_specs.append(pl.BlockSpec(b2.shape, lambda i: (0, 0)))

    kernel = functools.partial(_mlp_kernel, num_layers)

    # Advisory cost estimate so XLA schedules this tiny custom call sensibly.
    flops = 2 * padded_batch * sum(int(w.shape[0]) * int(w.shape[1]) for w in weights)
    transcendentals = padded_batch * sum(int(w.shape[1]) for w in weights[:-1])
    bytes_accessed = 4 * (
        int(x_p.size)
        + sum(int(w.size) for w in weights)
        + sum(int(b.size) for b in biases)
        + padded_batch * out_cols
    )

    out = pl.pallas_call(
        kernel,
        out_shape=jax.ShapeDtypeStruct((padded_batch, out_cols), jnp.float32),
        grid=grid,
        in_specs=in_specs,
        out_specs=pl.BlockSpec((tile, out_cols), lambda i: (i, 0)),
        compiler_params=pltpu.CompilerParams(dimension_semantics=("parallel",)),
        cost_estimate=pl.CostEstimate(
            flops=flops, transcendentals=transcendentals, bytes_accessed=bytes_accessed
        ),
    )(*args)

    if padded_batch != batch or out_cols != num_outputs:
        out = out[:batch, :num_outputs]
    return out


def init_value_network_params(key, num_inputs, num_hiddens, num_outputs):
    """Deterministic init matching torch.nn.Linear default (U(-1/sqrt(in), 1/sqrt(in))).

    Final layer: weight *= 0.1, bias *= 0.0 (as in the PyTorch module __init__).
    Returns weights as (in_f, out_f) — i.e. torch weight transposed.
    """
    dims = [num_inputs] + list(num_hiddens) + [num_outputs]
    weights, biases = [], []
    for i in range(len(dims) - 1):
        in_f, out_f = dims[i], dims[i + 1]
        key, kw, kb = jax.random.split(key, 3)
        bound = 1.0 / jnp.sqrt(jnp.float32(in_f))
        w = jax.random.uniform(kw, (in_f, out_f), jnp.float32, -bound, bound)
        b = jax.random.uniform(kb, (out_f,), jnp.float32, -bound, bound)
        if i == len(dims) - 2:  # action (final) layer
            w = w * 0.1
            b = b * 0.0
        weights.append(w)
        biases.append(b)
    return weights, biases


def value_network_ref(x, weights, biases):
    """Pure-JAX reference for correctness check."""
    h = x
    n = len(weights)
    for i, (w, b) in enumerate(zip(weights, biases)):
        h = h @ w + b
        if i < n - 1:
            h = jnp.tanh(h)
    return h


if __name__ == "__main__":
    key = jax.random.PRNGKey(0)

    num_inputs = 8
    num_hiddens = [32, 32]
    num_outputs = 4
    batch = 2

    kx, kp = jax.random.split(key)
    x = jax.random.normal(kx, (batch, num_inputs), jnp.float32)
    weights, biases = init_value_network_params(kp, num_inputs, num_hiddens, num_outputs)

    # Small-batch path (tail tile padded to 8 rows, 128-padded output store).
    out = value_network_forward(x, weights, biases)
    out = jax.block_until_ready(out)
    ref = value_network_ref(x, weights, biases)
    assert out.shape == (batch, num_outputs)
    assert jnp.allclose(out, ref, atol=1e-5, rtol=1e-5), "mismatch vs pure-JAX reference"

    # Medium batch: exercises the >=2-step grid (v7x megacore split), no x pad.
    big_batch = 512
    xb = jax.random.normal(jax.random.PRNGKey(1), (big_batch, num_inputs), jnp.float32)
    out_b = jax.block_until_ready(value_network_forward(xb, weights, biases))
    ref_b = value_network_ref(xb, weights, biases)
    assert out_b.shape == (big_batch, num_outputs)
    assert jnp.allclose(out_b, ref_b, atol=1e-5, rtol=1e-5), "mismatch (batched) vs reference"

    # Large batch: exercises the no-output-pad path (true-width store, no slice).
    large_batch = 4096
    xl = jax.random.normal(jax.random.PRNGKey(2), (large_batch, num_inputs), jnp.float32)
    out_l = jax.block_until_ready(value_network_forward(xl, weights, biases))
    ref_l = value_network_ref(xl, weights, biases)
    assert out_l.shape == (large_batch, num_outputs)
    assert jnp.allclose(out_l, ref_l, atol=1e-5, rtol=1e-5), "mismatch (large) vs reference"

    print("KERNEL_OK")
</pallas_src>

<mosaic_0001>
module attributes {stable_mosaic.version = 11 : i64} {
  func.func @_mlp_kernel(%arg0: i32, %arg1: memref<8x8xf32, #tpu.memory_space<vmem>>, %arg2: memref<8x32xf32, #tpu.memory_space<vmem>>, %arg3: memref<1x32xf32, #tpu.memory_space<vmem>>, %arg4: memref<32x32xf32, #tpu.memory_space<vmem>>, %arg5: memref<1x32xf32, #tpu.memory_space<vmem>>, %arg6: memref<32x128xf32, #tpu.memory_space<vmem>>, %arg7: memref<1x128xf32, #tpu.memory_space<vmem>>, %arg8: memref<8x128xf32, #tpu.memory_space<vmem>>) attributes {dimension_semantics = [#tpu.dimension_semantics<parallel>], iteration_bounds = array<i64: 1>, scalar_prefetch = 0 : i64, scratch_operands = 0 : i64, tpu.core_type = #tpu.core_type<tc>, window_params = [{transform_indices = @transform_0, window_bounds = array<i64: 8, 8>}, {pipeline_mode = #tpu.pipeline_mode<synchronous>, transform_indices = @transform_1, window_bounds = array<i64: 8, 32>}, {pipeline_mode = #tpu.pipeline_mode<synchronous>, transform_indices = @transform_2, window_bounds = array<i64: 1, 32>}, {pipeline_mode = #tpu.pipeline_mode<synchronous>, transform_indices = @transform_3, window_bounds = array<i64: 32, 32>}, {pipeline_mode = #tpu.pipeline_mode<synchronous>, transform_indices = @transform_4, window_bounds = array<i64: 1, 32>}, {pipeline_mode = #tpu.pipeline_mode<synchronous>, transform_indices = @transform_5, window_bounds = array<i64: 32, 128>}, {pipeline_mode = #tpu.pipeline_mode<synchronous>, transform_indices = @transform_6, window_bounds = array<i64: 1, 128>}, {transform_indices = @transform_7, window_bounds = array<i64: 8, 128>}]} {
    %c0 = arith.constant 0 : index
    %c0_0 = arith.constant 0 : index
    %0 = vector.load %arg1[%c0, %c0_0] : memref<8x8xf32, #tpu.memory_space<vmem>>, vector<8x8xf32>
    %c0_1 = arith.constant 0 : index
    %c0_2 = arith.constant 0 : index
    %1 = vector.load %arg2[%c0_1, %c0_2] : memref<8x32xf32, #tpu.memory_space<vmem>>, vector<8x32xf32>
    %cst = arith.constant dense<0.000000e+00> : vector<8x32xf32>
    %2 = tpu.matmul %0, %1, %cst {dimension_numbers = #tpu.dot_dimension_numbers<[1], [0], [0], [1], [0, 0, 1, 1], [], []>} : vector<8x8xf32>, vector<8x32xf32>, vector<8x32xf32> -> vector<8x32xf32>
    %c0_3 = arith.constant 0 : index
    %c0_4 = arith.constant 0 : index
    %3 = vector.load %arg3[%c0_3, %c0_4] : memref<1x32xf32, #tpu.memory_space<vmem>>, vector<1x32xf32>
    %4 = vector.broadcast %3 : vector<1x32xf32> to vector<8x32xf32>
    %5 = arith.addf %2, %4 : vector<8x32xf32>
    %6 = math.tanh %5 : vector<8x32xf32>
    %c0_5 = arith.constant 0 : index
    %c0_6 = arith.constant 0 : index
    %7 = vector.load %arg4[%c0_5, %c0_6] : memref<32x32xf32, #tpu.memory_space<vmem>>, vector<32x32xf32>
    %cst_7 = arith.constant dense<0.000000e+00> : vector<8x32xf32>
    %8 = tpu.matmul %6, %7, %cst_7 {dimension_numbers = #tpu.dot_dimension_numbers<[1], [0], [0], [1], [0, 0, 1, 1], [], []>} : vector<8x32xf32>, vector<32x32xf32>, vector<8x32xf32> -> vector<8x32xf32>
    %c0_8 = arith.constant 0 : index
    %c0_9 = arith.constant 0 : index
    %9 = vector.load %arg5[%c0_8, %c0_9] : memref<1x32xf32, #tpu.memory_space<vmem>>, vector<1x32xf32>
    %10 = vector.broadcast %9 : vector<1x32xf32> to vector<8x32xf32>
    %11 = arith.addf %8, %10 : vector<8x32xf32>
    %12 = math.tanh %11 : vector<8x32xf32>
    %c0_10 = arith.constant 0 : index
    %c0_11 = arith.constant 0 : index
    %13 = vector.load %arg6[%c0_10, %c0_11] : memref<32x128xf32, #tpu.memory_space<vmem>>, vector<32x128xf32>
    %cst_12 = arith.constant dense<0.000000e+00> : vector<8x128xf32>
    %14 = tpu.matmul %12, %13, %cst_12 {dimension_numbers = #tpu.dot_dimension_numbers<[1], [0], [0], [1], [0, 0, 1, 1], [], []>} : vector<8x32xf32>, vector<32x128xf32>, vector<8x128xf32> -> vector<8x128xf32>
    %c0_13 = arith.constant 0 : index
    %c0_14 = arith.constant 0 : index
    %15 = vector.load %arg7[%c0_13, %c0_14] : memref<1x128xf32, #tpu.memory_space<vmem>>, vector<1x128xf32>
    %16 = vector.broadcast %15 : vector<1x128xf32> to vector<8x128xf32>
    %17 = arith.addf %14, %16 : vector<8x128xf32>
    %c0_15 = arith.constant 0 : index
    %c0_16 = arith.constant 0 : index
    %18 = vector.load %arg8[%c0_15, %c0_16] : memref<8x128xf32, #tpu.memory_space<vmem>>, vector<8x128xf32>
    tpu.vector_store %arg8[%c0_15, %c0_16], %17 {strides = array<i32>} : memref<8x128xf32, #tpu.memory_space<vmem>>, vector<8x128xf32>,
    return
  }
  func.func @transform_0(%arg0: i32) -> (i32, i32) {
    %c0_i32 = arith.constant 0 : i32
    %c0_i32_0 = arith.constant 0 : i32
    return %arg0, %c0_i32 : i32, i32
  }
  func.func @transform_1(%arg0: i32) -> (i32, i32) {
    %c0_i32 = arith.constant 0 : i32
    %c0_i32_0 = arith.constant 0 : i32
    %c0_i32_1 = arith.constant 0 : i32
    return %c0_i32, %c0_i32_0 : i32, i32
  }
  func.func @transform_2(%arg0: i32) -> (i32, i32) {
    %c0_i32 = arith.constant 0 : i32
    %c0_i32_0 = arith.constant 0 : i32
    %c0_i32_1 = arith.constant 0 : i32
    return %c0_i32, %c0_i32_0 : i32, i32
  }
  func.func @transform_3(%arg0: i32) -> (i32, i32) {
    %c0_i32 = arith.constant 0 : i32
    %c0_i32_0 = arith.constant 0 : i32
    %c0_i32_1 = arith.constant 0 : i32
    return %c0_i32, %c0_i32_0 : i32, i32
  }
  func.func @transform_4(%arg0: i32) -> (i32, i32) {
    %c0_i32 = arith.constant 0 : i32
    %c0_i32_0 = arith.constant 0 : i32
    %c0_i32_1 = arith.constant 0 : i32
    return %c0_i32, %c0_i32_0 : i32, i32
  }
  func.func @transform_5(%arg0: i32) -> (i32, i32) {
    %c0_i32 = arith.constant 0 : i32
    %c0_i32_0 = arith.constant 0 : i32
    %c0_i32_1 = arith.constant 0 : i32
    return %c0_i32, %c0_i32_0 : i32, i32
  }
  func.func @transform_6(%arg0: i32) -> (i32, i32) {
    %c0_i32 = arith.constant 0 : i32
    %c0_i32_0 = arith.constant 0 : i32
    %c0_i32_1 = arith.constant 0 : i32
    return %c0_i32, %c0_i32_0 : i32, i32
  }
  func.func @transform_7(%arg0: i32) -> (i32, i32) {
    %c0_i32 = arith.constant 0 : i32
    %c0_i32_0 = arith.constant 0 : i32
    return %arg0, %c0_i32 : i32, i32
  }
}

</mosaic_0001>

<llo_original>
// kernel: tpu_custom_call.1
$region0: #{tpu_custom_call.1}
  #allocation0 [shape = 'u32[]', space=smem, size = 0x4, offset = 0x4, fixed_abs, tag = 'smem constant byte address 0x4 - core index']
  #allocation1 [shape = 'u32[144,128]{1,0:T(1,128)}', space=vmem, size = 0x12000, scoped, tag = 'internal scratch']
  %s0 = inlined_call_operand.hbm [shape: f32[8,8], index: 0, kind: input, shape index: {}]
  %s1 = inlined_call_operand.hbm [shape: f32[8,32], index: 1, kind: input, shape index: {}]
  %s2 = inlined_call_operand.vmem [shape: f32[1,32], index: 2, kind: input, shape index: {}]
  %s3 = inlined_call_operand.hbm [shape: f32[32,32], index: 3, kind: input, shape index: {}]
  %s4 = inlined_call_operand.vmem [shape: f32[1,32], index: 4, kind: input, shape index: {}]
  %s5 = inlined_call_operand.hbm [shape: f32[32,128], index: 5, kind: input, shape index: {}]
  %s6 = inlined_call_operand.vmem [shape: f32[1,128], index: 6, kind: input, shape index: {}]
  %s7 = inlined_call_operand.hbm [shape: f32[8,128], index: 7, kind: output, shape index: {}]
  %s8 = sld [smem:[#allocation0]]
  $region54: #{tpu_custom_call.1} parent=0
    _
  %s10 = ssub.s32 1, %s8
  %s11 = scalar_select 0, %s10, %s8
  $region1: #{tpu_custom_call.1} parent=0
    #allocation2 [shape = 'u8[4096]{0}', space=vmem, size = 0x1000, scoped, tag = 'input window, operand 0, single buffered']
    #allocation3 [shape = 's32[1]{0}', space=sflag, size = 0x4, scoped, tag = 'scoped memory for tpu_custom_call.1']
    #allocation4 [shape = 's32[1]{0}', space=sflag, size = 0x4, scoped, tag = 'scoped memory for tpu_custom_call.1']
    #allocation5 [shape = 'u8[4096]{0}', space=vmem, size = 0x1000, scoped, tag = 'input window, operand 1, single buffered']
    #allocation6 [shape = 's32[1]{0}', space=sflag, size = 0x4, scoped, tag = 'scoped memory for tpu_custom_call.1']
    #allocation7 [shape = 'u8[16384]{0}', space=vmem, size = 0x4000, scoped, tag = 'input window, operand 3, single buffered']
    #allocation8 [shape = 'u8[16384]{0}', space=vmem, size = 0x4000, scoped, tag = 'input window, operand 5, single buffered']
    #allocation9 [shape = 's32[1]{0}', space=sflag, size = 0x4, scoped, tag = 'scoped memory for tpu_custom_call.1']
    #allocation10 [shape = 'u8[4096]{0}', space=vmem, size = 0x1000, scoped, tag = 'output window, operand 0, single buffered']
    %12 = vsyncpa [#allocation3], 0
    %13 = vsyncpa [#allocation6], 0
    %14 = vsyncpa [#allocation9], 0
    %15 = vsyncpa [#allocation4], 0
    // Predicated region
    $region2: #{tpu_custom_call.1} parent=1 // pred_check
      _
    $region3: #{tpu_custom_call.1} parent=1 // pred_check_branch
      %17 = sbr.rel (0) target = $region5
    $region4: #{tpu_custom_call.1} parent=1 // pred_region
      %s19 = ssub.s32 128, 128
      %20 = vsyncadd [#allocation3], %s19
      %s22 = sshll.u32 [#allocation2], 4
      %s23 = int_to_ptr.vmem [resolvable:$true] %s22
      %25 = dma.hbm_to_vmem [thread:$0]  %s0, 128, %s23, [#allocation3]
    $region5: #{tpu_custom_call.1} parent=1 // pred_fallthru
      _
    // Predicated region
    $region6: #{tpu_custom_call.1} parent=1 // pred_check
      _
    $region7: #{tpu_custom_call.1} parent=1 // pred_check_branch
      %27 = sbr.rel (0) target = $region9
    $region8: #{tpu_custom_call.1} parent=1 // pred_region
      %s29 = ssub.s32 128, 128
      %30 = vsyncadd [#allocation6], %s29
      %s32 = sshll.u32 [#allocation5], 4
      %s33 = int_to_ptr.vmem [resolvable:$true] %s32
      %35 = dma.hbm_to_vmem [thread:$0]  %s1, 128, %s33, [#allocation6]
    $region9: #{tpu_custom_call.1} parent=1 // pred_fallthru
      _
    // Predicated region
    $region10: #{tpu_custom_call.1} parent=1 // pred_check
      _
    $region11: #{tpu_custom_call.1} parent=1 // pred_check_branch
      %37 = sbr.rel (0) target = $region13
    $region12: #{tpu_custom_call.1} parent=1 // pred_region
      _
    $region13: #{tpu_custom_call.1} parent=1 // pred_fallthru
      _
    // Predicated region
    $region14: #{tpu_custom_call.1} parent=1 // pred_check
      _
    $region15: #{tpu_custom_call.1} parent=1 // pred_check_branch
      %39 = sbr.rel (0) target = $region17
    $region16: #{tpu_custom_call.1} parent=1 // pred_region
      %s41 = ssub.s32 512, 512
      %42 = vsyncadd [#allocation6], %s41
      %s43 = sshll.u32 [#allocation7], 4
      %s44 = int_to_ptr.vmem [resolvable:$true] %s43
      %49 = dma.hbm_to_vmem [thread:$0]  %s3, 512, %s44, [#allocation6], 128, 128, 8
    $region17: #{tpu_custom_call.1} parent=1 // pred_fallthru
      _
    // Predicated region
    $region18: #{tpu_custom_call.1} parent=1 // pred_check
      _
    $region19: #{tpu_custom_call.1} parent=1 // pred_check_branch
      %51 = sbr.rel (0) target = $region21
    $region20: #{tpu_custom_call.1} parent=1 // pred_region
      _
    $region21: #{tpu_custom_call.1} parent=1 // pred_fallthru
      _
    // Predicated region
    $region22: #{tpu_custom_call.1} parent=1 // pred_check
      _
    $region23: #{tpu_custom_call.1} parent=1 // pred_check_branch
      %53 = sbr.rel (0) target = $region25
    $region24: #{tpu_custom_call.1} parent=1 // pred_region
      %s55 = ssub.s32 512, 512
      %56 = vsyncadd [#allocation9], %s55
      %s57 = sshll.u32 [#allocation8], 4
      %s58 = int_to_ptr.vmem [resolvable:$true] %s57
      %63 = dma.hbm_to_vmem [thread:$0]  %s5, 512, %s58, [#allocation9], 128, 128, 8
    $region25: #{tpu_custom_call.1} parent=1 // pred_fallthru
      _
    // Predicated region
    $region26: #{tpu_custom_call.1} parent=1 // pred_check
      _
    $region27: #{tpu_custom_call.1} parent=1 // pred_check_branch
      %65 = sbr.rel (0) target = $region29
    $region28: #{tpu_custom_call.1} parent=1 // pred_region
      _
    $region29: #{tpu_custom_call.1} parent=1 // pred_fallthru
      _
    // Predicated region
    $region30: #{tpu_custom_call.1} parent=1 // pred_check
      _
    $region31: #{tpu_custom_call.1} parent=1 // pred_check_branch
      %67 = sbr.rel (0) target = $region33
    $region32: #{tpu_custom_call.1} parent=1 // pred_region
      %68 = dma.done [#allocation3], 128
    $region33: #{tpu_custom_call.1} parent=1 // pred_fallthru
      _
    // Predicated region
    $region34: #{tpu_custom_call.1} parent=1 // pred_check
      _
    $region35: #{tpu_custom_call.1} parent=1 // pred_check_branch
      %70 = sbr.rel (0) target = $region37
    $region36: #{tpu_custom_call.1} parent=1 // pred_region
      %71 = dma.done [#allocation6], 128
    $region37: #{tpu_custom_call.1} parent=1 // pred_fallthru
      _
    // Predicated region
    $region38: #{tpu_custom_call.1} parent=1 // pred_check
      _
    $region39: #{tpu_custom_call.1} parent=1 // pred_check_branch
      %73 = sbr.rel (0) target = $region41
    $region40: #{tpu_custom_call.1} parent=1 // pred_region
      %74 = dma.done [#allocation6], 512
    $region41: #{tpu_custom_call.1} parent=1 // pred_fallthru
      _
    // Predicated region
    $region42: #{tpu_custom_call.1} parent=1 // pred_check
      _
    $region43: #{tpu_custom_call.1} parent=1 // pred_check_branch
      %76 = sbr.rel (0) target = $region45
    $region44: #{tpu_custom_call.1} parent=1 // pred_region
      %77 = dma.done [#allocation9], 512
    $region45: #{tpu_custom_call.1} parent=1 // pred_fallthru
      _
    %v78 = vld [vmem:[#allocation2] sm:$0xff]
    %v79 = vld [vmem:[#allocation5] sm:$0xff]
    %v80 = vld [vmem:[%s2] sm:$0x1]
    %v82 = vlaneseq
    %v83 = vshrl.u32 %v82, 7
    %v84 = vsub.s32 0, %v83
    %v85 = vrot.slane %v80, %v84
    %vm87 = vcmask 64512
    %v89 = vsel %vm87, %v78, 0
    %91 = vmatprep.subr.mxu0 0.0
    %92 = vmatpush1.msra.mxu0 %v79
    %93 = vmatprep.subr.mxu0 0.0
    %94 = vmatpush1.msra.mxu0 0.0
    %95 = vmatprep.subr.mxu0 0.0
    %96 = vmatpush1.msra.mxu0 0.0
    %97 = vmatprep.subr.mxu0 0.0
    %98 = vmatpush1.msra.mxu0 0.0
    %99 = vmatprep.subr.mxu0 0.0
    %100 = vmatpush1.msra.mxu0 0.0
    %101 = vmatprep.subr.mxu0 0.0
    %102 = vmatpush1.msra.mxu0 0.0
    %103 = vmatprep.subr.mxu0 0.0
    %104 = vmatpush1.msra.mxu0 0.0
    %105 = vmatprep.subr.mxu0 0.0
    %106 = vmatpush1.msra.mxu0 0.0
    %107 = vmatprep.subr.mxu0 0.0
    %108 = vmatpush1.msra.mxu0 0.0
    %109 = vmatprep.subr.mxu0 0.0
    %110 = vmatpush1.msra.mxu0 0.0
    %111 = vmatprep.subr.mxu0 0.0
    %112 = vmatpush1.msra.mxu0 0.0
    %113 = vmatprep.subr.mxu0 0.0
    %114 = vmatpush1.msra.mxu0 0.0
    %115 = vmatprep.subr.mxu0 0.0
    %116 = vmatpush1.msra.mxu0 0.0
    %117 = vmatprep.subr.mxu0 0.0
    %118 = vmatpush1.msra.mxu0 0.0
    %119 = vmatprep.subr.mxu0 0.0
    %120 = vmatpush1.msra.mxu0 0.0
    %121 = vmatprep.subr.mxu0 0.0
    %122 = vmatpush1.msra.mxu0 0.0
    %123 = vmatprep.subr.mxu0 0.0
    %124 = vmatpush1.msra.mxu0 0.0
    %125 = vmatprep.subr.mxu0 0.0
    %126 = vmatpush1.msra.mxu0 0.0
    %127 = vmatprep.subr.mxu0 0.0
    %128 = vmatpush1.msra.mxu0 0.0
    %129 = vmatprep.subr.mxu0 0.0
    %130 = vmatpush1.msra.mxu0 0.0
    %131 = vmatprep.subr.mxu0 0.0
    %132 = vmatpush1.msra.mxu0 0.0
    %133 = vmatprep.subr.mxu0 0.0
    %134 = vmatpush1.msra.mxu0 0.0
    %135 = vmatprep.subr.mxu0 0.0
    %136 = vmatpush1.msra.mxu0 0.0
    %137 = vmatprep.subr.mxu0 0.0
    %138 = vmatpush1.msra.mxu0 0.0
    %139 = vmatprep.subr.mxu0 0.0
    %140 = vmatpush1.msra.mxu0 0.0
    %141 = vmatprep.subr.mxu0 0.0
    %142 = vmatpush1.msra.mxu0 0.0
    %143 = vmatprep.subr.mxu0 0.0
    %144 = vmatpush1.msra.mxu0 0.0
    %145 = vmatprep.subr.mxu0 0.0
    %146 = vmatpush1.msra.mxu0 0.0
    %147 = vmatprep.subr.mxu0 0.0
    %148 = vmatpush1.msra.mxu0 0.0
    %149 = vmatprep.subr.mxu0 0.0
    %150 = vmatpush1.msra.mxu0 0.0
    %151 = vmatprep.subr.mxu0 0.0
    %152 = vmatpush1.msra.mxu0 0.0
    %153 = vmatprep.subr.mxu0 0.0
    %154 = vmatpush1.msra.mxu0 0.0
    %155 = vmatprep.mubr.f32.mxu0 0.0
    %156 = vmatmul.mubr.f32.gmra.mrb[0].mxu0 %v89
    %v157 = vpop.f32.mrb[0].mxu0
    %v158 = vadd.f32 %v85, %v157
    %v159 = vpop.f32.mrb[0].mxu0
    %160 = vdwg.mxu0
    %v161 = vtanh.pop %v158
    %v162 = vld [vmem:[#allocation7] sm:$0xff]
    %v163 = vld [vmem:[#allocation7 + $0x8] sm:$0xff]
    %v164 = vld [vmem:[#allocation7 + $0x10] sm:$0xff]
    %v165 = vld [vmem:[#allocation7 + $0x18] sm:$0xff]
    %v166 = vld [vmem:[%s4] sm:$0x1]
    %v168 = vlaneseq
    %v169 = vshrl.u32 %v168, 7
    %v170 = vsub.s32 0, %v169
    %v171 = vrot.slane %v166, %v170
    %vm173 = vcmask 261120
    %v175 = vsel %vm173, %v161, 0
    %177 = vmatprep.subr.mxu0 0.0
    %178 = vmatpush1.msra.mxu0 %v162
    %179 = vmatprep.subr.mxu0 0.0
    %180 = vmatpush1.msra.mxu0 %v163
    %181 = vmatprep.subr.mxu0 0.0
    %182 = vmatpush1.msra.mxu0 %v164
    %183 = vmatprep.subr.mxu0 0.0
    %184 = vmatpush1.msra.mxu0 %v165
    %185 = vmatprep.subr.mxu0 0.0
    %186 = vmatpush1.msra.mxu0 0.0
    %187 = vmatprep.subr.mxu0 0.0
    %188 = vmatpush1.msra.mxu0 0.0
    %189 = vmatprep.subr.mxu0 0.0
    %190 = vmatpush1.msra.mxu0 0.0
    %191 = vmatprep.subr.mxu0 0.0
    %192 = vmatpush1.msra.mxu0 0.0
    %193 = vmatprep.subr.mxu0 0.0
    %194 = vmatpush1.msra.mxu0 0.0
    %195 = vmatprep.subr.mxu0 0.0
    %196 = vmatpush1.msra.mxu0 0.0
    %197 = vmatprep.subr.mxu0 0.0
    %198 = vmatpush1.msra.mxu0 0.0
    %199 = vmatprep.subr.mxu0 0.0
    %200 = vmatpush1.msra.mxu0 0.0
    %201 = vmatprep.subr.mxu0 0.0
    %202 = vmatpush1.msra.mxu0 0.0
    %203 = vmatprep.subr.mxu0 0.0
    %204 = vmatpush1.msra.mxu0 0.0
    %205 = vmatprep.subr.mxu0 0.0
    %206 = vmatpush1.msra.mxu0 0.0
    %207 = vmatprep.subr.mxu0 0.0
    %208 = vmatpush1.msra.mxu0 0.0
    %209 = vmatprep.subr.mxu0 0.0
    %210 = vmatpush1.msra.mxu0 0.0
    %211 = vmatprep.subr.mxu0 0.0
    %212 = vmatpush1.msra.mxu0 0.0
    %213 = vmatprep.subr.mxu0 0.0
    %214 = vmatpush1.msra.mxu0 0.0
    %215 = vmatprep.subr.mxu0 0.0
    %216 = vmatpush1.msra.mxu0 0.0
    %217 = vmatprep.subr.mxu0 0.0
    %218 = vmatpush1.msra.mxu0 0.0
    %219 = vmatprep.subr.mxu0 0.0
    %220 = vmatpush1.msra.mxu0 0.0
    %221 = vmatprep.subr.mxu0 0.0
    %222 = vmatpush1.msra.mxu0 0.0
    %223 = vmatprep.subr.mxu0 0.0
    %224 = vmatpush1.msra.mxu0 0.0
    %225 = vmatprep.subr.mxu0 0.0
    %226 = vmatpush1.msra.mxu0 0.0
    %227 = vmatprep.subr.mxu0 0.0
    %228 = vmatpush1.msra.mxu0 0.0
    %229 = vmatprep.subr.mxu0 0.0
    %230 = vmatpush1.msra.mxu0 0.0
    %231 = vmatprep.subr.mxu0 0.0
    %232 = vmatpush1.msra.mxu0 0.0
    %233 = vmatprep.subr.mxu0 0.0
    %234 = vmatpush1.msra.mxu0 0.0
    %235 = vmatprep.subr.mxu0 0.0
    %236 = vmatpush1.msra.mxu0 0.0
    %237 = vmatprep.subr.mxu0 0.0
    %238 = vmatpush1.msra.mxu0 0.0
    %239 = vmatprep.subr.mxu0 0.0
    %240 = vmatpush1.msra.mxu0 0.0
    %241 = vmatprep.mubr.f32.mxu0 0.0
    %242 = vmatmul.mubr.f32.gmra.mrb[0].mxu0 %v175
    %v243 = vpop.f32.mrb[0].mxu0
    %v244 = vadd.f32 %v171, %v243
    %v245 = vpop.f32.mrb[0].mxu0
    %246 = vdwg.mxu0
    %v247 = vtanh.pop %v244
    %v248 = vld [vmem:[#allocation8] sm:$0xff]
    %v249 = vld [vmem:[#allocation8 + $0x8] sm:$0xff]
    %v250 = vld [vmem:[#allocation8 + $0x10] sm:$0xff]
    %v251 = vld [vmem:[#allocation8 + $0x18] sm:$0xff]
    %v252 = vld [vmem:[%s6] sm:$0x1]
    %v254 = vlaneseq
    %v255 = vshrl.u32 %v254, 7
    %v256 = vsub.s32 0, %v255
    %v257 = vrot.slane %v252, %v256
    %v260 = vsel %vm173, %v247, 0
    %262 = vmatprep.subr.mxu0 0.0
    %263 = vmatpush1.msra.mxu0 %v248
    %264 = vmatprep.subr.mxu0 0.0
    %265 = vmatpush1.msra.mxu0 %v249
    %266 = vmatprep.subr.mxu0 0.0
    %267 = vmatpush1.msra.mxu0 %v250
    %268 = vmatprep.subr.mxu0 0.0
    %269 = vmatpush1.msra.mxu0 %v251
    %270 = vmatprep.subr.mxu0 0.0
    %271 = vmatpush1.msra.mxu0 0.0
    %272 = vmatprep.subr.mxu0 0.0
    %273 = vmatpush1.msra.mxu0 0.0
    %274 = vmatprep.subr.mxu0 0.0
    %275 = vmatpush1.msra.mxu0 0.0
    %276 = vmatprep.subr.mxu0 0.0
    %277 = vmatpush1.msra.mxu0 0.0
    %278 = vmatprep.subr.mxu0 0.0
    %279 = vmatpush1.msra.mxu0 0.0
    %280 = vmatprep.subr.mxu0 0.0
    %281 = vmatpush1.msra.mxu0 0.0
    %282 = vmatprep.subr.mxu0 0.0
    %283 = vmatpush1.msra.mxu0 0.0
    %284 = vmatprep.subr.mxu0 0.0
    %285 = vmatpush1.msra.mxu0 0.0
    %286 = vmatprep.subr.mxu0 0.0
    %287 = vmatpush1.msra.mxu0 0.0
    %288 = vmatprep.subr.mxu0 0.0
    %289 = vmatpush1.msra.mxu0 0.0
    %290 = vmatprep.subr.mxu0 0.0
    %291 = vmatpush1.msra.mxu0 0.0
    %292 = vmatprep.subr.mxu0 0.0
    %293 = vmatpush1.msra.mxu0 0.0
    %294 = vmatprep.subr.mxu0 0.0
    %295 = vmatpush1.msra.mxu0 0.0
    %296 = vmatprep.subr.mxu0 0.0
    %297 = vmatpush1.msra.mxu0 0.0
    %298 = vmatprep.subr.mxu0 0.0
    %299 = vmatpush1.msra.mxu0 0.0
    %300 = vmatprep.subr.mxu0 0.0
    %301 = vmatpush1.msra.mxu0 0.0
    %302 = vmatprep.subr.mxu0 0.0
    %303 = vmatpush1.msra.mxu0 0.0
    %304 = vmatprep.subr.mxu0 0.0
    %305 = vmatpush1.msra.mxu0 0.0
    %306 = vmatprep.subr.mxu0 0.0
    %307 = vmatpush1.msra.mxu0 0.0
    %308 = vmatprep.subr.mxu0 0.0
    %309 = vmatpush1.msra.mxu0 0.0
    %310 = vmatprep.subr.mxu0 0.0
    %311 = vmatpush1.msra.mxu0 0.0
    %312 = vmatprep.subr.mxu0 0.0
    %313 = vmatpush1.msra.mxu0 0.0
    %314 = vmatprep.subr.mxu0 0.0
    %315 = vmatpush1.msra.mxu0 0.0
    %316 = vmatprep.subr.mxu0 0.0
    %317 = vmatpush1.msra.mxu0 0.0
    %318 = vmatprep.subr.mxu0 0.0
    %319 = vmatpush1.msra.mxu0 0.0
    %320 = vmatprep.subr.mxu0 0.0
    %321 = vmatpush1.msra.mxu0 0.0
    %322 = vmatprep.subr.mxu0 0.0
    %323 = vmatpush1.msra.mxu0 0.0
    %324 = vmatprep.subr.mxu0 0.0
    %325 = vmatpush1.msra.mxu0 0.0
    %326 = vmatprep.mubr.f32.mxu0 0.0
    %327 = vmatmul.mubr.f32.gmra.mrb[0].mxu0 %v260
    %v328 = vpop.f32.mrb[0].mxu0
    %v329 = vadd.f32 %v257, %v328
    %v330 = vpop.f32.mrb[0].mxu0
    %331 = vdwg.mxu0
    %332 = vst [vmem:[#allocation10] sm:$0xff] %v329
    // Predicated region
    $region46: #{tpu_custom_call.1} parent=1 // pred_check
      _
    $region47: #{tpu_custom_call.1} parent=1 // pred_check_branch
      %334 = sbr.rel (0) target = $region49
    $region48: #{tpu_custom_call.1} parent=1 // pred_region
      %s336 = ssub.s32 128, 128
      %337 = vsyncadd [#allocation4], %s336
      %s339 = sshll.u32 [#allocation10], 4
      %s340 = int_to_ptr.vmem [resolvable:$true] %s339
      %342 = dma.vmem_to_hbm [thread:$0]  %s340, 128, %s7, [#allocation4]
    $region49: #{tpu_custom_call.1} parent=1 // pred_fallthru
      _
    // Predicated region
    $region50: #{tpu_custom_call.1} parent=1 // pred_check
      _
    $region51: #{tpu_custom_call.1} parent=1 // pred_check_branch
      %344 = sbr.rel (0) target = $region53
    $region52: #{tpu_custom_call.1} parent=1 // pred_region
      %345 = dma.done [#allocation4], 128
    $region53: #{tpu_custom_call.1} parent=1 // pred_fallthru
      _
    %346 = vsyncpa [#allocation3], 1
    %347 = vsyncpa [#allocation6], 1
    %348 = vsyncpa [#allocation9], 1
    %349 = vsyncpa [#allocation4], 1

</llo_original>
